<compile_context>
chip_gen: v7x
topology: tpu7x:2x2x1
jax: 0.10.0
libtpu: 0.0.40
codegen_flags: <defaults>
</compile_context>

<pallas_src>
from functools import partial

import jax
import jax.numpy as jnp
from jax.experimental import pallas as pl
from jax.experimental.pallas import tpu as pltpu


def _round_up(x, m):
    return ((x + m - 1) // m) * m


def graphany_kernel(dist_ref, yp_ref, w1_ref, b1_ref, w2_ref, b2_ref,
                    fused_t_ref, att_t_ref, *, n_class, c_pred):
    # ---- MLP(dist): Linear -> ReLU -> Linear (BN + temperature folded into w2/b2) ----
    dist = dist_ref[...]                                                  # (TN, D) f32
    h = jnp.dot(dist, w1_ref[...], preferred_element_type=jnp.float32) + b1_ref[...]
    h = jnp.maximum(h, 0.0)                                               # ReLU (eval dropout = identity)
    logit = jnp.dot(h, w2_ref[...], preferred_element_type=jnp.float32) + b2_ref[...]  # (TN, C), already / T

    # ---- temperature softmax over channels (denominator reciprocal on the EUP slot) ----
    m = jnp.max(logit, axis=-1, keepdims=True)
    e = jnp.exp(logit - m)
    att = e * pl.reciprocal(jnp.sum(e, axis=-1, keepdims=True), approx=True)  # (TN, C)

    # ---- fuse per-channel predictions (unrolled over C), softmax over classes ----
    yp = yp_ref[...].astype(jnp.float32)                                  # (TN, C*K) bf16 -> f32
    fused = att[:, 0:1] * yp[:, 0:n_class]
    for c in range(1, c_pred):
        fused = fused + att[:, c:c + 1] * yp[:, c * n_class:(c + 1) * n_class]
    mf = jnp.max(fused, axis=-1, keepdims=True)
    ef = jnp.exp(fused - mf)
    fused = ef / jnp.sum(ef, axis=-1, keepdims=True)                      # exact class probabilities

    # ---- lane-dense transposed stores: lane dim = row tile (multiple of 128) ----
    fused_t_ref[...] = fused.T                                            # (K, TN)
    att_t_ref[...] = att.T                                                # (C, TN)


def graphany_forward(dist, y_pred, params, att_temperature, *,
                     block_rows=4096, y_pred_dtype=jnp.bfloat16):
    """Returns (fused_y (N, n_class), attention (N, C_pred))."""
    n, c_pred, n_class = y_pred.shape
    d_dist = dist.shape[1]
    w1, b1, bn_gamma, bn_beta, bn_mean, bn_var, w2, b2 = params

    # Fold eval-mode BatchNorm1d and the attention temperature into w2/b2.
    eps = 1e-5
    bn_scale = bn_gamma / jnp.sqrt(bn_var + eps)
    bn_shift = bn_beta - bn_mean * bn_scale
    t = float(att_temperature)
    w1 = w1.astype(jnp.float32)
    b1_2d = b1.reshape(1, -1).astype(jnp.float32)
    w2f = (bn_scale[:, None] * w2 / t).astype(jnp.float32)               # (H, C)
    b2f = ((b2 + bn_shift @ w2) / t).reshape(1, -1).astype(jnp.float32)  # (1, C)

    # Row tiling: TN multiple of 128 (lane-dense transposed outputs), pad N up.
    block_rows = _round_up(int(block_rows), 128)
    tn = min(block_rows, _round_up(n, 128))
    n_pad = _round_up(n, tn)
    grid = (n_pad // tn,)

    dist_p = jnp.pad(dist.astype(jnp.float32), ((0, n_pad - n), (0, 0)))
    # Lane-dense flat layout (N, C*K); bf16 halves the dominant HBM read.
    yp_flat = y_pred.reshape(n, c_pred * n_class).astype(y_pred_dtype)
    yp_p = jnp.pad(yp_flat, ((0, n_pad - n), (0, 0)))

    const_map = lambda i: (0, 0)
    grid_spec = pltpu.PrefetchScalarGridSpec(
        num_scalar_prefetch=0,
        grid=grid,
        in_specs=[
            pl.BlockSpec((tn, d_dist), lambda i: (i, 0)),
            pl.BlockSpec((tn, c_pred * n_class), lambda i: (i, 0)),
            pl.BlockSpec(w1.shape, const_map),       # resident params: fetched once
            pl.BlockSpec(b1_2d.shape, const_map),
            pl.BlockSpec(w2f.shape, const_map),
            pl.BlockSpec(b2f.shape, const_map),
        ],
        out_specs=(
            pl.BlockSpec((n_class, tn), lambda i: (0, i)),
            pl.BlockSpec((c_pred, tn), lambda i: (0, i)),
        ),
    )

    fused_t, att_t = pl.pallas_call(
        partial(graphany_kernel, n_class=n_class, c_pred=c_pred),
        out_shape=(
            jax.ShapeDtypeStruct((n_class, n_pad), jnp.float32),
            jax.ShapeDtypeStruct((c_pred, n_pad), jnp.float32),
        ),
        grid_spec=grid_spec,
        compiler_params=pltpu.CompilerParams(
            dimension_semantics=("parallel",)),
    )(dist_p, yp_p, w1, b1_2d, w2f, b2f)

    fused = fused_t[:, :n].T
    att = att_t[:, :n].T
    return fused, att


def graphany_reference(dist, y_pred, params, att_temperature):
    w1, b1, bn_gamma, bn_beta, bn_mean, bn_var, w2, b2 = params
    eps = 1e-5
    h = jnp.maximum(dist @ w1 + b1, 0.0)
    h = (h - bn_mean) / jnp.sqrt(bn_var + eps) * bn_gamma + bn_beta
    att = jax.nn.softmax((h @ w2 + b2) / att_temperature, axis=-1)
    fused = jax.nn.softmax(jnp.sum(att[:, :, None] * y_pred, axis=1), axis=-1)
    return fused, att


if __name__ == "__main__":
    key = jax.random.PRNGKey(0)

    # Module hyper-params (small, consistent with GraphAny.__init__).
    n_feat_channels = 4                      # e.g. ('X', 'L', 'L2', 'H')
    n_pred_channels = 4
    dist_feat_dim = n_feat_channels * (n_feat_channels - 1)   # 12
    n_hidden = 32
    n_class = 8
    att_temperature = 5.0
    num_nodes = 64
    batch = 16

    keys = jax.random.split(key, 10)

    # Per-channel node logits (the `logit_dicts[c]['y']` arrays) and gather glue.
    y_all = jax.random.normal(keys[0], (n_pred_channels, num_nodes, n_class),
                              dtype=jnp.float32)
    batch_indices = jnp.arange(batch, dtype=jnp.int32) * 3 % num_nodes
    # (N, C_pred, n_class) — matches torch.stack([...], dim=1)
    y_pred = jnp.transpose(jnp.take(y_all, batch_indices, axis=1), (1, 0, 2))

    # Precomputed pairwise distance features (stand-in for compute_dist).
    dist = jax.nn.softmax(jax.random.normal(keys[1], (batch, dist_feat_dim)), axis=-1)
    dist = dist.astype(jnp.float32)

    # MLP(dist_feat_dim -> n_hidden -> n_pred_channels) params + BatchNorm1d stats.
    w1 = 0.1 * jax.random.normal(keys[2], (dist_feat_dim, n_hidden), dtype=jnp.float32)
    b1 = 0.05 * jax.random.normal(keys[3], (n_hidden,), dtype=jnp.float32)
    bn_gamma = 1.0 + 0.1 * jax.random.normal(keys[4], (n_hidden,), dtype=jnp.float32)
    bn_beta = 0.1 * jax.random.normal(keys[5], (n_hidden,), dtype=jnp.float32)
    bn_mean = 0.05 * jax.random.normal(keys[6], (n_hidden,), dtype=jnp.float32)
    bn_var = jnp.abs(1.0 + 0.1 * jax.random.normal(keys[7], (n_hidden,), dtype=jnp.float32))
    w2 = 0.1 * jax.random.normal(keys[8], (n_hidden, n_pred_channels), dtype=jnp.float32)
    b2 = 0.05 * jax.random.normal(keys[9], (n_pred_channels,), dtype=jnp.float32)
    params = (w1, b1, bn_gamma, bn_beta, bn_mean, bn_var, w2, b2)

    fused_y, attention = graphany_forward(dist, y_pred, params, att_temperature)
    fused_y = jax.block_until_ready(fused_y)
    attention = jax.block_until_ready(attention)

    # Tight check: reference fed the same bf16-rounded y_pred the kernel stores,
    # so remaining diffs are kernel arithmetic only (approx reciprocal etc.).
    yp_rounded = y_pred.astype(jnp.bfloat16).astype(jnp.float32)
    ref_fused_r, ref_att_r = graphany_reference(dist, yp_rounded, params, att_temperature)
    assert jnp.allclose(fused_y, ref_fused_r, atol=5e-3, rtol=5e-3)
    assert jnp.allclose(attention, ref_att_r, atol=5e-3, rtol=5e-3)

    # End-to-end check against the full-f32 reference (bf16 y_pred storage is a
    # deliberate, documented numerics trade-off for HBM bandwidth).
    ref_fused, ref_att = graphany_reference(dist, y_pred, params, att_temperature)
    assert jnp.allclose(fused_y, ref_fused, atol=3e-2, rtol=3e-2)
    assert jnp.allclose(attention, ref_att, atol=3e-2, rtol=3e-2)

    # Exercise the multi-tile grid + padded tail path (N=300, 128-row tiles -> grid=3).
    n2 = 300
    k2 = jax.random.split(keys[1], 2)
    dist2 = jax.nn.softmax(jax.random.normal(k2[0], (n2, dist_feat_dim)), axis=-1)
    dist2 = dist2.astype(jnp.float32)
    y_pred2 = jax.random.normal(k2[1], (n2, n_pred_channels, n_class), dtype=jnp.float32)
    fused2, att2 = graphany_forward(dist2, y_pred2, params, att_temperature,
                                    block_rows=128)
    fused2 = jax.block_until_ready(fused2)
    att2 = jax.block_until_ready(att2)
    rf2, ra2 = graphany_reference(dist2, y_pred2.astype(jnp.bfloat16).astype(jnp.float32),
                                  params, att_temperature)
    assert jnp.allclose(fused2, rf2, atol=5e-3, rtol=5e-3)
    assert jnp.allclose(att2, ra2, atol=5e-3, rtol=5e-3)

    # Module also returns attention.mean(0).tolist()  (glue, not kernel work).
    _att_mean = [float(v) for v in jnp.mean(attention, axis=0)]

    print("KERNEL_OK")
</pallas_src>

<mosaic_0001>
module attributes {stable_mosaic.version = 11 : i64} {
  func.func @graphany_kernel(%arg0: i32, %arg1: memref<128x12xf32, #tpu.memory_space<vmem>>, %arg2: memref<128x32xbf16, #tpu.memory_space<vmem>>, %arg3: memref<12x32xf32, #tpu.memory_space<vmem>>, %arg4: memref<1x32xf32, #tpu.memory_space<vmem>>, %arg5: memref<32x4xf32, #tpu.memory_space<vmem>>, %arg6: memref<1x4xf32, #tpu.memory_space<vmem>>, %arg7: memref<8x128xf32, #tpu.memory_space<vmem>>, %arg8: memref<4x128xf32, #tpu.memory_space<vmem>>) attributes {dimension_semantics = [#tpu.dimension_semantics<parallel>], iteration_bounds = array<i64: 1>, scalar_prefetch = 0 : i64, scratch_operands = 0 : i64, tpu.core_type = #tpu.core_type<tc>, window_params = [{transform_indices = @transform_0, window_bounds = array<i64: 128, 12>}, {transform_indices = @transform_1, window_bounds = array<i64: 128, 32>}, {pipeline_mode = #tpu.pipeline_mode<synchronous>, transform_indices = @transform_2, window_bounds = array<i64: 12, 32>}, {pipeline_mode = #tpu.pipeline_mode<synchronous>, transform_indices = @transform_3, window_bounds = array<i64: 1, 32>}, {pipeline_mode = #tpu.pipeline_mode<synchronous>, transform_indices = @transform_4, window_bounds = array<i64: 32, 4>}, {pipeline_mode = #tpu.pipeline_mode<synchronous>, transform_indices = @transform_5, window_bounds = array<i64: 1, 4>}, {transform_indices = @transform_6, window_bounds = array<i64: 8, 128>}, {transform_indices = @transform_7, window_bounds = array<i64: 4, 128>}]} {
    %c0 = arith.constant 0 : index
    %c0_0 = arith.constant 0 : index
    %0 = vector.load %arg1[%c0, %c0_0] : memref<128x12xf32, #tpu.memory_space<vmem>>, vector<128x12xf32>
    %c0_1 = arith.constant 0 : index
    %c0_2 = arith.constant 0 : index
    %1 = vector.load %arg3[%c0_1, %c0_2] : memref<12x32xf32, #tpu.memory_space<vmem>>, vector<12x32xf32>
    %cst = arith.constant dense<0.000000e+00> : vector<128x32xf32>
    %2 = tpu.matmul %0, %1, %cst {dimension_numbers = #tpu.dot_dimension_numbers<[1], [0], [0], [1], [0, 0, 1, 1], [], []>} : vector<128x12xf32>, vector<12x32xf32>, vector<128x32xf32> -> vector<128x32xf32>
    %c0_3 = arith.constant 0 : index
    %c0_4 = arith.constant 0 : index
    %3 = vector.load %arg4[%c0_3, %c0_4] : memref<1x32xf32, #tpu.memory_space<vmem>>, vector<1x32xf32>
    %4 = vector.broadcast %3 : vector<1x32xf32> to vector<128x32xf32>
    %5 = arith.addf %2, %4 : vector<128x32xf32>
    %cst_5 = arith.constant 0.000000e+00 : f32
    %6 = vector.broadcast %cst_5 : f32 to vector<128x32xf32>
    %7 = arith.maximumf %5, %6 : vector<128x32xf32>
    %c0_6 = arith.constant 0 : index
    %c0_7 = arith.constant 0 : index
    %8 = vector.load %arg5[%c0_6, %c0_7] : memref<32x4xf32, #tpu.memory_space<vmem>>, vector<32x4xf32>
    %cst_8 = arith.constant dense<0.000000e+00> : vector<128x4xf32>
    %9 = tpu.matmul %7, %8, %cst_8 {dimension_numbers = #tpu.dot_dimension_numbers<[1], [0], [0], [1], [0, 0, 1, 1], [], []>} : vector<128x32xf32>, vector<32x4xf32>, vector<128x4xf32> -> vector<128x4xf32>
    %c0_9 = arith.constant 0 : index
    %c0_10 = arith.constant 0 : index
    %10 = vector.load %arg6[%c0_9, %c0_10] : memref<1x4xf32, #tpu.memory_space<vmem>>, vector<1x4xf32>
    %11 = vector.broadcast %10 : vector<1x4xf32> to vector<128x4xf32>
    %12 = arith.addf %9, %11 : vector<128x4xf32>
    %cst_11 = arith.constant dense<0xFF800000> : vector<128xf32>
    %13 = vector.multi_reduction <maximumf>, %12, %cst_11 [1] : vector<128x4xf32> to vector<128xf32>
    %14 = vector.shape_cast %13 : vector<128xf32> to vector<128x1xf32>
    %15 = vector.broadcast %14 : vector<128x1xf32> to vector<128x4xf32>
    %16 = arith.subf %12, %15 : vector<128x4xf32>
    %17 = math.exp %16 : vector<128x4xf32>
    %cst_12 = arith.constant dense<0.000000e+00> : vector<128xf32>
    %18 = vector.multi_reduction <add>, %17, %cst_12 [1] : vector<128x4xf32> to vector<128xf32>
    %19 = vector.shape_cast %18 : vector<128xf32> to vector<128x1xf32>
    %20 = tpu.reciprocal %19 {approx = true} : vector<128x1xf32> -> vector<128x1xf32>
    %21 = vector.broadcast %20 : vector<128x1xf32> to vector<128x4xf32>
    %22 = arith.mulf %17, %21 : vector<128x4xf32>
    %c0_13 = arith.constant 0 : index
    %c0_14 = arith.constant 0 : index
    %23 = vector.load %arg2[%c0_13, %c0_14] : memref<128x32xbf16, #tpu.memory_space<vmem>>, vector<128x32xbf16>
    %24 = arith.extf %23 : vector<128x32xbf16> to vector<128x32xf32>
    %25 = vector.extract_strided_slice %22 {offsets = [0, 0], sizes = [128, 1], strides = [1, 1]} : vector<128x4xf32> to vector<128x1xf32>
    %26 = vector.extract_strided_slice %24 {offsets = [0, 0], sizes = [128, 8], strides = [1, 1]} : vector<128x32xf32> to vector<128x8xf32>
    %27 = vector.broadcast %25 : vector<128x1xf32> to vector<128x8xf32>
    %28 = arith.mulf %27, %26 : vector<128x8xf32>
    %29 = vector.extract_strided_slice %22 {offsets = [0, 1], sizes = [128, 1], strides = [1, 1]} : vector<128x4xf32> to vector<128x1xf32>
    %30 = vector.extract_strided_slice %24 {offsets = [0, 8], sizes = [128, 8], strides = [1, 1]} : vector<128x32xf32> to vector<128x8xf32>
    %31 = vector.broadcast %29 : vector<128x1xf32> to vector<128x8xf32>
    %32 = arith.mulf %31, %30 : vector<128x8xf32>
    %33 = arith.addf %28, %32 : vector<128x8xf32>
    %34 = vector.extract_strided_slice %22 {offsets = [0, 2], sizes = [128, 1], strides = [1, 1]} : vector<128x4xf32> to vector<128x1xf32>
    %35 = vector.extract_strided_slice %24 {offsets = [0, 16], sizes = [128, 8], strides = [1, 1]} : vector<128x32xf32> to vector<128x8xf32>
    %36 = vector.broadcast %34 : vector<128x1xf32> to vector<128x8xf32>
    %37 = arith.mulf %36, %35 : vector<128x8xf32>
    %38 = arith.addf %33, %37 : vector<128x8xf32>
    %39 = vector.extract_strided_slice %22 {offsets = [0, 3], sizes = [128, 1], strides = [1, 1]} : vector<128x4xf32> to vector<128x1xf32>
    %40 = vector.extract_strided_slice %24 {offsets = [0, 24], sizes = [128, 8], strides = [1, 1]} : vector<128x32xf32> to vector<128x8xf32>
    %41 = vector.broadcast %39 : vector<128x1xf32> to vector<128x8xf32>
    %42 = arith.mulf %41, %40 : vector<128x8xf32>
    %43 = arith.addf %38, %42 : vector<128x8xf32>
    %cst_15 = arith.constant dense<0xFF800000> : vector<128xf32>
    %44 = vector.multi_reduction <maximumf>, %43, %cst_15 [1] : vector<128x8xf32> to vector<128xf32>
    %45 = vector.shape_cast %44 : vector<128xf32> to vector<128x1xf32>
    %46 = vector.broadcast %45 : vector<128x1xf32> to vector<128x8xf32>
    %47 = arith.subf %43, %46 : vector<128x8xf32>
    %48 = math.exp %47 : vector<128x8xf32>
    %cst_16 = arith.constant dense<0.000000e+00> : vector<128xf32>
    %49 = vector.multi_reduction <add>, %48, %cst_16 [1] : vector<128x8xf32> to vector<128xf32>
    %50 = vector.shape_cast %49 : vector<128xf32> to vector<128x1xf32>
    %51 = vector.broadcast %50 : vector<128x1xf32> to vector<128x8xf32>
    %52 = arith.divf %48, %51 : vector<128x8xf32>
    %53 = tpu.transpose %52, [1, 0] : vector<128x8xf32> -> vector<8x128xf32>
    %c0_17 = arith.constant 0 : index
    %c0_18 = arith.constant 0 : index
    %54 = vector.load %arg7[%c0_17, %c0_18] : memref<8x128xf32, #tpu.memory_space<vmem>>, vector<8x128xf32>
    tpu.vector_store %arg7[%c0_17, %c0_18], %53 {strides = array<i32>} : memref<8x128xf32, #tpu.memory_space<vmem>>, vector<8x128xf32>,
    %55 = tpu.transpose %22, [1, 0] : vector<128x4xf32> -> vector<4x128xf32>
    %c0_19 = arith.constant 0 : index
    %c0_20 = arith.constant 0 : index
    %56 = vector.load %arg8[%c0_19, %c0_20] : memref<4x128xf32, #tpu.memory_space<vmem>>, vector<4x128xf32>
    tpu.vector_store %arg8[%c0_19, %c0_20], %55 {strides = array<i32>} : memref<4x128xf32, #tpu.memory_space<vmem>>, vector<4x128xf32>,
    return
  }
  func.func @transform_0(%arg0: i32) -> (i32, i32) {
    %c0_i32 = arith.constant 0 : i32
    %c0_i32_0 = arith.constant 0 : i32
    return %arg0, %c0_i32 : i32, i32
  }
  func.func @transform_1(%arg0: i32) -> (i32, i32) {
    %c0_i32 = arith.constant 0 : i32
    %c0_i32_0 = arith.constant 0 : i32
    return %arg0, %c0_i32 : i32, i32
  }
  func.func @transform_2(%arg0: i32) -> (i32, i32) {
    %c0_i32 = arith.constant 0 : i32
    %c0_i32_0 = arith.constant 0 : i32
    %c0_i32_1 = arith.constant 0 : i32
    return %c0_i32, %c0_i32_0 : i32, i32
  }
  func.func @transform_3(%arg0: i32) -> (i32, i32) {
    %c0_i32 = arith.constant 0 : i32
    %c0_i32_0 = arith.constant 0 : i32
    %c0_i32_1 = arith.constant 0 : i32
    return %c0_i32, %c0_i32_0 : i32, i32
  }
  func.func @transform_4(%arg0: i32) -> (i32, i32) {
    %c0_i32 = arith.constant 0 : i32
    %c0_i32_0 = arith.constant 0 : i32
    %c0_i32_1 = arith.constant 0 : i32
    return %c0_i32, %c0_i32_0 : i32, i32
  }
  func.func @transform_5(%arg0: i32) -> (i32, i32) {
    %c0_i32 = arith.constant 0 : i32
    %c0_i32_0 = arith.constant 0 : i32
    %c0_i32_1 = arith.constant 0 : i32
    return %c0_i32, %c0_i32_0 : i32, i32
  }
  func.func @transform_6(%arg0: i32) -> (i32, i32) {
    %c0_i32 = arith.constant 0 : i32
    %c0_i32_0 = arith.constant 0 : i32
    return %c0_i32, %arg0 : i32, i32
  }
  func.func @transform_7(%arg0: i32) -> (i32, i32) {
    %c0_i32 = arith.constant 0 : i32
    %c0_i32_0 = arith.constant 0 : i32
    return %c0_i32, %arg0 : i32, i32
  }
}

</mosaic_0001>

<llo_original>
// kernel: tpu_custom_call.1
$region0: #{tpu_custom_call.1}
  #allocation0 [shape = 'u32[]', space=smem, size = 0x4, offset = 0x4, fixed_abs, tag = 'smem constant byte address 0x4 - core index']
  #allocation1 [shape = 'u32[144,128]{1,0:T(1,128)}', space=vmem, size = 0x12000, scoped, tag = 'internal scratch']
  %s0 = inlined_call_operand.vmem [shape: f32[128,12], index: 0, kind: input, shape index: {}]
  %s1 = inlined_call_operand.vmem [shape: bf16[128,32], index: 1, kind: input, shape index: {}]
  %s2 = inlined_call_operand.vmem [shape: f32[12,32], index: 2, kind: input, shape index: {}]
  %s3 = inlined_call_operand.vmem [shape: f32[1,32], index: 3, kind: input, shape index: {}]
  %s4 = inlined_call_operand.vmem [shape: f32[32,4], index: 4, kind: input, shape index: {}]
  %s5 = inlined_call_operand.vmem [shape: f32[1,4], index: 5, kind: input, shape index: {}]
  %s6 = inlined_call_operand.hbm [shape: f32[8,128], index: 6, kind: output, shape index: {0}]
  %s7 = inlined_call_operand.hbm [shape: f32[4,128], index: 7, kind: output, shape index: {1}]
  %8 = xla_tuple %s6, %s7
  %s9 = sld [smem:[#allocation0]]
  $region42: #{tpu_custom_call.1} parent=0
    _
  %s11 = ssub.s32 1, %s9
  %s12 = scalar_select 0, %s11, %s9
  $region1: #{tpu_custom_call.1} parent=0
    #allocation2 [shape = 'u8[4096]{0}', space=vmem, size = 0x1000, scoped, tag = 'output window, operand 0, single buffered']
    #allocation3 [shape = 's32[1]{0}', space=sflag, size = 0x4, scoped, tag = 'scoped memory for tpu_custom_call.1']
    #allocation4 [shape = 'u8[2048]{0}', space=vmem, size = 0x800, scoped, tag = 'output window, operand 1, single buffered']
    #allocation5 [shape = 's32[1]{0}', space=sflag, size = 0x4, scoped, tag = 'scoped memory for tpu_custom_call.1']
    %13 = vsyncpa [#allocation3], 0
    %14 = vsyncpa [#allocation5], 0
    // Predicated region
    $region2: #{tpu_custom_call.1} parent=1 // pred_check
      _
    $region3: #{tpu_custom_call.1} parent=1 // pred_check_branch
      %16 = sbr.rel (0) target = $region5
    $region4: #{tpu_custom_call.1} parent=1 // pred_region
      _
    $region5: #{tpu_custom_call.1} parent=1 // pred_fallthru
      _
    // Predicated region
    $region6: #{tpu_custom_call.1} parent=1 // pred_check
      _
    $region7: #{tpu_custom_call.1} parent=1 // pred_check_branch
      %18 = sbr.rel (0) target = $region9
    $region8: #{tpu_custom_call.1} parent=1 // pred_region
      _
    $region9: #{tpu_custom_call.1} parent=1 // pred_fallthru
      _
    // Predicated region
    $region10: #{tpu_custom_call.1} parent=1 // pred_check
      _
    $region11: #{tpu_custom_call.1} parent=1 // pred_check_branch
      %20 = sbr.rel (0) target = $region13
    $region12: #{tpu_custom_call.1} parent=1 // pred_region
      _
    $region13: #{tpu_custom_call.1} parent=1 // pred_fallthru
      _
    // Predicated region
    $region14: #{tpu_custom_call.1} parent=1 // pred_check
      _
    $region15: #{tpu_custom_call.1} parent=1 // pred_check_branch
      %22 = sbr.rel (0) target = $region17
    $region16: #{tpu_custom_call.1} parent=1 // pred_region
      _
    $region17: #{tpu_custom_call.1} parent=1 // pred_fallthru
      _
    // Predicated region
    $region18: #{tpu_custom_call.1} parent=1 // pred_check
      _
    $region19: #{tpu_custom_call.1} parent=1 // pred_check_branch
      %24 = sbr.rel (0) target = $region21
    $region20: #{tpu_custom_call.1} parent=1 // pred_region
      _
    $region21: #{tpu_custom_call.1} parent=1 // pred_fallthru
      _
    // Predicated region
    $region22: #{tpu_custom_call.1} parent=1 // pred_check
      _
    $region23: #{tpu_custom_call.1} parent=1 // pred_check_branch
      %26 = sbr.rel (0) target = $region25
    $region24: #{tpu_custom_call.1} parent=1 // pred_region
      _
    $region25: #{tpu_custom_call.1} parent=1 // pred_fallthru
      _
    %v27 = vld [vmem:[%s0] sm:$0xff]
    %v28 = vld [vmem:[%s0 + $0x8] sm:$0xff]
    %v29 = vld [vmem:[%s0 + $0x10] sm:$0xff]
    %v30 = vld [vmem:[%s0 + $0x18] sm:$0xff]
    %v31 = vld [vmem:[%s0 + $0x20] sm:$0xff]
    %v32 = vld [vmem:[%s0 + $0x28] sm:$0xff]
    %v33 = vld [vmem:[%s0 + $0x30] sm:$0xff]
    %v34 = vld [vmem:[%s0 + $0x38] sm:$0xff]
    %v35 = vld [vmem:[%s0 + $0x40] sm:$0xff]
    %v36 = vld [vmem:[%s0 + $0x48] sm:$0xff]
    %v37 = vld [vmem:[%s0 + $0x50] sm:$0xff]
    %v38 = vld [vmem:[%s0 + $0x58] sm:$0xff]
    %v39 = vld [vmem:[%s0 + $0x60] sm:$0xff]
    %v40 = vld [vmem:[%s0 + $0x68] sm:$0xff]
    %v41 = vld [vmem:[%s0 + $0x70] sm:$0xff]
    %v42 = vld [vmem:[%s0 + $0x78] sm:$0xff]
    %v43 = vld [vmem:[%s2] sm:$0xff]
    %v44 = vld [vmem:[%s2 + $0x8] sm:$0xf]
    %v45 = vld [vmem:[%s3] sm:$0x1]
    %v47 = vlaneseq
    %v48 = vshrl.u32 %v47, 7
    %v49 = vsub.s32 0, %v48
    %v50 = vrot.slane %v45, %v49
    %vm52 = vcmask 97280
    %v54 = vsel %vm52, %v27, 0
    %v57 = vsel %vm52, %v28, 0
    %v60 = vsel %vm52, %v29, 0
    %v63 = vsel %vm52, %v30, 0
    %v66 = vsel %vm52, %v31, 0
    %v69 = vsel %vm52, %v32, 0
    %v72 = vsel %vm52, %v33, 0
    %v75 = vsel %vm52, %v34, 0
    %v78 = vsel %vm52, %v35, 0
    %v81 = vsel %vm52, %v36, 0
    %v84 = vsel %vm52, %v37, 0
    %v87 = vsel %vm52, %v38, 0
    %v90 = vsel %vm52, %v39, 0
    %v93 = vsel %vm52, %v40, 0
    %v96 = vsel %vm52, %v41, 0
    %v99 = vsel %vm52, %v42, 0
    %vm101 = vcmask 1043456
    %v103 = vsel %vm101, %v44, 0
    %105 = vmatprep.subr.mxu0 0.0
    %106 = vmatpush1.msra.mxu0 %v43
    %107 = vmatprep.subr.mxu0 0.0
    %108 = vmatpush1.msra.mxu0 %v103
    %109 = vmatprep.subr.mxu0 0.0
    %110 = vmatpush1.msra.mxu0 0.0
    %111 = vmatprep.subr.mxu0 0.0
    %112 = vmatpush1.msra.mxu0 0.0
    %113 = vmatprep.subr.mxu0 0.0
    %114 = vmatpush1.msra.mxu0 0.0
    %115 = vmatprep.subr.mxu0 0.0
    %116 = vmatpush1.msra.mxu0 0.0
    %117 = vmatprep.subr.mxu0 0.0
    %118 = vmatpush1.msra.mxu0 0.0
    %119 = vmatprep.subr.mxu0 0.0
    %120 = vmatpush1.msra.mxu0 0.0
    %121 = vmatprep.subr.mxu0 0.0
    %122 = vmatpush1.msra.mxu0 0.0
    %123 = vmatprep.subr.mxu0 0.0
    %124 = vmatpush1.msra.mxu0 0.0
    %125 = vmatprep.subr.mxu0 0.0
    %126 = vmatpush1.msra.mxu0 0.0
    %127 = vmatprep.subr.mxu0 0.0
    %128 = vmatpush1.msra.mxu0 0.0
    %129 = vmatprep.subr.mxu0 0.0
    %130 = vmatpush1.msra.mxu0 0.0
    %131 = vmatprep.subr.mxu0 0.0
    %132 = vmatpush1.msra.mxu0 0.0
    %133 = vmatprep.subr.mxu0 0.0
    %134 = vmatpush1.msra.mxu0 0.0
    %135 = vmatprep.subr.mxu0 0.0
    %136 = vmatpush1.msra.mxu0 0.0
    %137 = vmatprep.subr.mxu0 0.0
    %138 = vmatpush1.msra.mxu0 0.0
    %139 = vmatprep.subr.mxu0 0.0
    %140 = vmatpush1.msra.mxu0 0.0
    %141 = vmatprep.subr.mxu0 0.0
    %142 = vmatpush1.msra.mxu0 0.0
    %143 = vmatprep.subr.mxu0 0.0
    %144 = vmatpush1.msra.mxu0 0.0
    %145 = vmatprep.subr.mxu0 0.0
    %146 = vmatpush1.msra.mxu0 0.0
    %147 = vmatprep.subr.mxu0 0.0
    %148 = vmatpush1.msra.mxu0 0.0
    %149 = vmatprep.subr.mxu0 0.0
    %150 = vmatpush1.msra.mxu0 0.0
    %151 = vmatprep.subr.mxu0 0.0
    %152 = vmatpush1.msra.mxu0 0.0
    %153 = vmatprep.subr.mxu0 0.0
    %154 = vmatpush1.msra.mxu0 0.0
    %155 = vmatprep.subr.mxu0 0.0
    %156 = vmatpush1.msra.mxu0 0.0
    %157 = vmatprep.subr.mxu0 0.0
    %158 = vmatpush1.msra.mxu0 0.0
    %159 = vmatprep.subr.mxu0 0.0
    %160 = vmatpush1.msra.mxu0 0.0
    %161 = vmatprep.subr.mxu0 0.0
    %162 = vmatpush1.msra.mxu0 0.0
    %163 = vmatprep.subr.mxu0 0.0
    %164 = vmatpush1.msra.mxu0 0.0
    %165 = vmatprep.subr.mxu0 0.0
    %166 = vmatpush1.msra.mxu0 0.0
    %167 = vmatprep.subr.mxu0 0.0
    %168 = vmatpush1.msra.mxu0 0.0
    %169 = vmatprep.mubr.f32.mxu0 0.0
    %170 = vmatmul.mubr.f32.gmra.mrb[0].mxu0 %v54
    %v171 = vpop.f32.mrb[0].mxu0
    %v172 = vadd.f32 %v50, %v171
    %v173 = vpop.f32.mrb[0].mxu0
    %174 = vmatprep.mubr.f32.mxu0 0.0
    %175 = vmatmul.mubr.f32.gmra.mrb[0].mxu0 %v57
    %v176 = vpop.f32.mrb[0].mxu0
    %v177 = vadd.f32 %v50, %v176
    %v178 = vpop.f32.mrb[0].mxu0
    %179 = vmatprep.mubr.f32.mxu0 0.0
    %180 = vmatmul.mubr.f32.gmra.mrb[0].mxu0 %v60
    %v181 = vpop.f32.mrb[0].mxu0
    %v182 = vadd.f32 %v50, %v181
    %v183 = vpop.f32.mrb[0].mxu0
    %184 = vmatprep.mubr.f32.mxu0 0.0
    %185 = vmatmul.mubr.f32.gmra.mrb[0].mxu0 %v63
    %v186 = vpop.f32.mrb[0].mxu0
    %v187 = vadd.f32 %v50, %v186
    %v188 = vpop.f32.mrb[0].mxu0
    %189 = vmatprep.mubr.f32.mxu0 0.0
    %190 = vmatmul.mubr.f32.gmra.mrb[0].mxu0 %v66
    %v191 = vpop.f32.mrb[0].mxu0
    %v192 = vadd.f32 %v50, %v191
    %v193 = vpop.f32.mrb[0].mxu0
    %194 = vmatprep.mubr.f32.mxu0 0.0
    %195 = vmatmul.mubr.f32.gmra.mrb[0].mxu0 %v69
    %v196 = vpop.f32.mrb[0].mxu0
    %v197 = vadd.f32 %v50, %v196
    %v198 = vpop.f32.mrb[0].mxu0
    %199 = vmatprep.mubr.f32.mxu0 0.0
    %200 = vmatmul.mubr.f32.gmra.mrb[0].mxu0 %v72
    %v201 = vpop.f32.mrb[0].mxu0
    %v202 = vadd.f32 %v50, %v201
    %v203 = vpop.f32.mrb[0].mxu0
    %204 = vmatprep.mubr.f32.mxu0 0.0
    %205 = vmatmul.mubr.f32.gmra.mrb[0].mxu0 %v75
    %v206 = vpop.f32.mrb[0].mxu0
    %v207 = vadd.f32 %v50, %v206
    %v208 = vpop.f32.mrb[0].mxu0
    %209 = vmatprep.mubr.f32.mxu0 0.0
    %210 = vmatmul.mubr.f32.gmra.mrb[0].mxu0 %v78
    %v211 = vpop.f32.mrb[0].mxu0
    %v212 = vadd.f32 %v50, %v211
    %v213 = vpop.f32.mrb[0].mxu0
    %214 = vmatprep.mubr.f32.mxu0 0.0
    %215 = vmatmul.mubr.f32.gmra.mrb[0].mxu0 %v81
    %v216 = vpop.f32.mrb[0].mxu0
    %v217 = vadd.f32 %v50, %v216
    %v218 = vpop.f32.mrb[0].mxu0
    %219 = vmatprep.mubr.f32.mxu0 0.0
    %220 = vmatmul.mubr.f32.gmra.mrb[0].mxu0 %v84
    %v221 = vpop.f32.mrb[0].mxu0
    %v222 = vadd.f32 %v50, %v221
    %v223 = vpop.f32.mrb[0].mxu0
    %224 = vmatprep.mubr.f32.mxu0 0.0
    %225 = vmatmul.mubr.f32.gmra.mrb[0].mxu0 %v87
    %v226 = vpop.f32.mrb[0].mxu0
    %v227 = vadd.f32 %v50, %v226
    %v228 = vpop.f32.mrb[0].mxu0
    %229 = vmatprep.mubr.f32.mxu0 0.0
    %230 = vmatmul.mubr.f32.gmra.mrb[0].mxu0 %v90
    %v231 = vpop.f32.mrb[0].mxu0
    %v232 = vadd.f32 %v50, %v231
    %v233 = vpop.f32.mrb[0].mxu0
    %234 = vmatprep.mubr.f32.mxu0 0.0
    %235 = vmatmul.mubr.f32.gmra.mrb[0].mxu0 %v93
    %v236 = vpop.f32.mrb[0].mxu0
    %v237 = vadd.f32 %v50, %v236
    %v238 = vpop.f32.mrb[0].mxu0
    %239 = vmatprep.mubr.f32.mxu0 0.0
    %240 = vmatmul.mubr.f32.gmra.mrb[0].mxu0 %v96
    %v241 = vpop.f32.mrb[0].mxu0
    %v242 = vadd.f32 %v50, %v241
    %v243 = vpop.f32.mrb[0].mxu0
    %244 = vmatprep.mubr.f32.mxu0 0.0
    %245 = vmatmul.mubr.f32.gmra.mrb[0].mxu0 %v99
    %v246 = vpop.f32.mrb[0].mxu0
    %v247 = vadd.f32 %v50, %v246
    %v248 = vpop.f32.mrb[0].mxu0
    %249 = vdwg.mxu0
    %v250 = vmax.f32 %v172, 0.0
    %v251 = vmax.f32 %v177, 0.0
    %v252 = vmax.f32 %v182, 0.0
    %v253 = vmax.f32 %v187, 0.0
    %v254 = vmax.f32 %v192, 0.0
    %v255 = vmax.f32 %v197, 0.0
    %v256 = vmax.f32 %v202, 0.0
    %v257 = vmax.f32 %v207, 0.0
    %v258 = vmax.f32 %v212, 0.0
    %v259 = vmax.f32 %v217, 0.0
    %v260 = vmax.f32 %v222, 0.0
    %v261 = vmax.f32 %v227, 0.0
    %v262 = vmax.f32 %v232, 0.0
    %v263 = vmax.f32 %v237, 0.0
    %v264 = vmax.f32 %v242, 0.0
    %v265 = vmax.f32 %v247, 0.0
    %v266 = vld [vmem:[%s4] sm:$0xff]
    %v267 = vld [vmem:[%s4 + $0x8] sm:$0xff]
    %v268 = vld [vmem:[%s4 + $0x10] sm:$0xff]
    %v269 = vld [vmem:[%s4 + $0x18] sm:$0xff]
    %v270 = vld [vmem:[%s5] sm:$0x1]
    %v272 = vlaneseq
    %v273 = vshrl.u32 %v272, 7
    %v274 = vsub.s32 0, %v273
    %v275 = vrot.slane %v270, %v274
    %vm277 = vcmask 261120
    %v279 = vsel %vm277, %v250, 0
    %v282 = vsel %vm277, %v251, 0
    %v285 = vsel %vm277, %v252, 0
    %v288 = vsel %vm277, %v253, 0
    %v291 = vsel %vm277, %v254, 0
    %v294 = vsel %vm277, %v255, 0
    %v297 = vsel %vm277, %v256, 0
    %v300 = vsel %vm277, %v257, 0
    %v303 = vsel %vm277, %v258, 0
    %v306 = vsel %vm277, %v259, 0
    %v309 = vsel %vm277, %v260, 0
    %v312 = vsel %vm277, %v261, 0
    %v315 = vsel %vm277, %v262, 0
    %v318 = vsel %vm277, %v263, 0
    %v321 = vsel %vm277, %v264, 0
    %v324 = vsel %vm277, %v265, 0
    %326 = vmatprep.subr.mxu0 0.0
    %327 = vmatpush1.msra.mxu0 %v266
    %328 = vmatprep.subr.mxu0 0.0
    %329 = vmatpush1.msra.mxu0 %v267
    %330 = vmatprep.subr.mxu0 0.0
    %331 = vmatpush1.msra.mxu0 %v268
    %332 = vmatprep.subr.mxu0 0.0
    %333 = vmatpush1.msra.mxu0 %v269
    %334 = vmatprep.subr.mxu0 0.0
    %335 = vmatpush1.msra.mxu0 0.0
    %336 = vmatprep.subr.mxu0 0.0
    %337 = vmatpush1.msra.mxu0 0.0
    %338 = vmatprep.subr.mxu0 0.0
    %339 = vmatpush1.msra.mxu0 0.0
    %340 = vmatprep.subr.mxu0 0.0
    %341 = vmatpush1.msra.mxu0 0.0
    %342 = vmatprep.subr.mxu0 0.0
    %343 = vmatpush1.msra.mxu0 0.0
    %344 = vmatprep.subr.mxu0 0.0
    %345 = vmatpush1.msra.mxu0 0.0
    %346 = vmatprep.subr.mxu0 0.0
    %347 = vmatpush1.msra.mxu0 0.0
    %348 = vmatprep.subr.mxu0 0.0
    %349 = vmatpush1.msra.mxu0 0.0
    %350 = vmatprep.subr.mxu0 0.0
    %351 = vmatpush1.msra.mxu0 0.0
    %352 = vmatprep.subr.mxu0 0.0
    %353 = vmatpush1.msra.mxu0 0.0
    %354 = vmatprep.subr.mxu0 0.0
    %355 = vmatpush1.msra.mxu0 0.0
    %356 = vmatprep.subr.mxu0 0.0
    %357 = vmatpush1.msra.mxu0 0.0
    %358 = vmatprep.subr.mxu0 0.0
    %359 = vmatpush1.msra.mxu0 0.0
    %360 = vmatprep.subr.mxu0 0.0
    %361 = vmatpush1.msra.mxu0 0.0
    %362 = vmatprep.subr.mxu0 0.0
    %363 = vmatpush1.msra.mxu0 0.0
    %364 = vmatprep.subr.mxu0 0.0
    %365 = vmatpush1.msra.mxu0 0.0
    %366 = vmatprep.subr.mxu0 0.0
    %367 = vmatpush1.msra.mxu0 0.0
    %368 = vmatprep.subr.mxu0 0.0
    %369 = vmatpush1.msra.mxu0 0.0
    %370 = vmatprep.subr.mxu0 0.0
    %371 = vmatpush1.msra.mxu0 0.0
    %372 = vmatprep.subr.mxu0 0.0
    %373 = vmatpush1.msra.mxu0 0.0
    %374 = vmatprep.subr.mxu0 0.0
    %375 = vmatpush1.msra.mxu0 0.0
    %376 = vmatprep.subr.mxu0 0.0
    %377 = vmatpush1.msra.mxu0 0.0
    %378 = vmatprep.subr.mxu0 0.0
    %379 = vmatpush1.msra.mxu0 0.0
    %380 = vmatprep.subr.mxu0 0.0
    %381 = vmatpush1.msra.mxu0 0.0
    %382 = vmatprep.subr.mxu0 0.0
    %383 = vmatpush1.msra.mxu0 0.0
    %384 = vmatprep.subr.mxu0 0.0
    %385 = vmatpush1.msra.mxu0 0.0
    %386 = vmatprep.subr.mxu0 0.0
    %387 = vmatpush1.msra.mxu0 0.0
    %388 = vmatprep.subr.mxu0 0.0
    %389 = vmatpush1.msra.mxu0 0.0
    %390 = vmatprep.mubr.f32.mxu0 0.0
    %391 = vmatmul.mubr.f32.gmra.mrb[0].mxu0 %v279
    %v392 = vpop.f32.mrb[0].mxu0
    %v393 = vadd.f32 %v275, %v392
    %v394 = vpop.f32.mrb[0].mxu0
    %395 = vmatprep.mubr.f32.mxu0 0.0
    %396 = vmatmul.mubr.f32.gmra.mrb[0].mxu0 %v282
    %v397 = vpop.f32.mrb[0].mxu0
    %v398 = vadd.f32 %v275, %v397
    %v399 = vpop.f32.mrb[0].mxu0
    %400 = vmatprep.mubr.f32.mxu0 0.0
    %401 = vmatmul.mubr.f32.gmra.mrb[0].mxu0 %v285
    %v402 = vpop.f32.mrb[0].mxu0
    %v403 = vadd.f32 %v275, %v402
    %v404 = vpop.f32.mrb[0].mxu0
    %405 = vmatprep.mubr.f32.mxu0 0.0
    %406 = vmatmul.mubr.f32.gmra.mrb[0].mxu0 %v288
    %v407 = vpop.f32.mrb[0].mxu0
    %v408 = vadd.f32 %v275, %v407
    %v409 = vpop.f32.mrb[0].mxu0
    %410 = vmatprep.mubr.f32.mxu0 0.0
    %411 = vmatmul.mubr.f32.gmra.mrb[0].mxu0 %v291
    %v412 = vpop.f32.mrb[0].mxu0
    %v413 = vadd.f32 %v275, %v412
    %v414 = vpop.f32.mrb[0].mxu0
    %415 = vmatprep.mubr.f32.mxu0 0.0
    %416 = vmatmul.mubr.f32.gmra.mrb[0].mxu0 %v294
    %v417 = vpop.f32.mrb[0].mxu0
    %v418 = vadd.f32 %v275, %v417
    %v419 = vpop.f32.mrb[0].mxu0
    %420 = vmatprep.mubr.f32.mxu0 0.0
    %421 = vmatmul.mubr.f32.gmra.mrb[0].mxu0 %v297
    %v422 = vpop.f32.mrb[0].mxu0
    %v423 = vadd.f32 %v275, %v422
    %v424 = vpop.f32.mrb[0].mxu0
    %425 = vmatprep.mubr.f32.mxu0 0.0
    %426 = vmatmul.mubr.f32.gmra.mrb[0].mxu0 %v300
    %v427 = vpop.f32.mrb[0].mxu0
    %v428 = vadd.f32 %v275, %v427
    %v429 = vpop.f32.mrb[0].mxu0
    %430 = vmatprep.mubr.f32.mxu0 0.0
    %431 = vmatmul.mubr.f32.gmra.mrb[0].mxu0 %v303
    %v432 = vpop.f32.mrb[0].mxu0
    %v433 = vadd.f32 %v275, %v432
    %v434 = vpop.f32.mrb[0].mxu0
    %435 = vmatprep.mubr.f32.mxu0 0.0
    %436 = vmatmul.mubr.f32.gmra.mrb[0].mxu0 %v306
    %v437 = vpop.f32.mrb[0].mxu0
    %v438 = vadd.f32 %v275, %v437
    %v439 = vpop.f32.mrb[0].mxu0
    %440 = vmatprep.mubr.f32.mxu0 0.0
    %441 = vmatmul.mubr.f32.gmra.mrb[0].mxu0 %v309
    %v442 = vpop.f32.mrb[0].mxu0
    %v443 = vadd.f32 %v275, %v442
    %v444 = vpop.f32.mrb[0].mxu0
    %445 = vmatprep.mubr.f32.mxu0 0.0
    %446 = vmatmul.mubr.f32.gmra.mrb[0].mxu0 %v312
    %v447 = vpop.f32.mrb[0].mxu0
    %v448 = vadd.f32 %v275, %v447
    %v449 = vpop.f32.mrb[0].mxu0
    %450 = vmatprep.mubr.f32.mxu0 0.0
    %451 = vmatmul.mubr.f32.gmra.mrb[0].mxu0 %v315
    %v452 = vpop.f32.mrb[0].mxu0
    %v453 = vadd.f32 %v275, %v452
    %v454 = vpop.f32.mrb[0].mxu0
    %455 = vmatprep.mubr.f32.mxu0 0.0
    %456 = vmatmul.mubr.f32.gmra.mrb[0].mxu0 %v318
    %v457 = vpop.f32.mrb[0].mxu0
    %v458 = vadd.f32 %v275, %v457
    %v459 = vpop.f32.mrb[0].mxu0
    %460 = vmatprep.mubr.f32.mxu0 0.0
    %461 = vmatmul.mubr.f32.gmra.mrb[0].mxu0 %v321
    %v462 = vpop.f32.mrb[0].mxu0
    %v463 = vadd.f32 %v275, %v462
    %v464 = vpop.f32.mrb[0].mxu0
    %465 = vmatprep.mubr.f32.mxu0 0.0
    %466 = vmatmul.mubr.f32.gmra.mrb[0].mxu0 %v324
    %v467 = vpop.f32.mrb[0].mxu0
    %v468 = vadd.f32 %v275, %v467
    %v469 = vpop.f32.mrb[0].mxu0
    %470 = vdwg.mxu0
    %vm471 = vcmask 31744
    %v472 = vsel %vm471, %v393, -inf
    %473 = vmax.xlane.f32.xlu0 %v472
    %v474 = vpop.xlane.xlu0 %473
    %v475 = vsel %vm471, %v398, -inf
    %476 = vmax.xlane.f32.xlu0 %v475
    %v477 = vpop.xlane.xlu0 %476
    %v478 = vsel %vm471, %v403, -inf
    %479 = vmax.xlane.f32.xlu0 %v478
    %v480 = vpop.xlane.xlu0 %479
    %v481 = vsel %vm471, %v408, -inf
    %482 = vmax.xlane.f32.xlu0 %v481
    %v483 = vpop.xlane.xlu0 %482
    %v484 = vsel %vm471, %v413, -inf
    %485 = vmax.xlane.f32.xlu0 %v484
    %v486 = vpop.xlane.xlu0 %485
    %v487 = vsel %vm471, %v418, -inf
    %488 = vmax.xlane.f32.xlu0 %v487
    %v489 = vpop.xlane.xlu0 %488
    %v490 = vsel %vm471, %v423, -inf
    %491 = vmax.xlane.f32.xlu0 %v490
    %v492 = vpop.xlane.xlu0 %491
    %v493 = vsel %vm471, %v428, -inf
    %494 = vmax.xlane.f32.xlu0 %v493
    %v495 = vpop.xlane.xlu0 %494
    %v496 = vsel %vm471, %v433, -inf
    %497 = vmax.xlane.f32.xlu0 %v496
    %v498 = vpop.xlane.xlu0 %497
    %v499 = vsel %vm471, %v438, -inf
    %500 = vmax.xlane.f32.xlu0 %v499
    %v501 = vpop.xlane.xlu0 %500
    %v502 = vsel %vm471, %v443, -inf
    %503 = vmax.xlane.f32.xlu0 %v502
    %v504 = vpop.xlane.xlu0 %503
    %v505 = vsel %vm471, %v448, -inf
    %506 = vmax.xlane.f32.xlu0 %v505
    %v507 = vpop.xlane.xlu0 %506
    %v508 = vsel %vm471, %v453, -inf
    %509 = vmax.xlane.f32.xlu0 %v508
    %v510 = vpop.xlane.xlu0 %509
    %v511 = vsel %vm471, %v458, -inf
    %512 = vmax.xlane.f32.xlu0 %v511
    %v513 = vpop.xlane.xlu0 %512
    %v514 = vsel %vm471, %v463, -inf
    %515 = vmax.xlane.f32.xlu0 %v514
    %v516 = vpop.xlane.xlu0 %515
    %v517 = vsel %vm471, %v468, -inf
    %518 = vmax.xlane.f32.xlu0 %v517
    %v519 = vpop.xlane.xlu0 %518
    %v520 = vsub.f32 %v393, %v474
    %v521 = vsub.f32 %v398, %v477
    %v522 = vsub.f32 %v403, %v480
    %v523 = vsub.f32 %v408, %v483
    %v524 = vsub.f32 %v413, %v486
    %v525 = vsub.f32 %v418, %v489
    %v526 = vsub.f32 %v423, %v492
    %v527 = vsub.f32 %v428, %v495
    %v528 = vsub.f32 %v433, %v498
    %v529 = vsub.f32 %v438, %v501
    %v530 = vsub.f32 %v443, %v504
    %v531 = vsub.f32 %v448, %v507
    %v532 = vsub.f32 %v453, %v510
    %v533 = vsub.f32 %v458, %v513
    %v534 = vsub.f32 %v463, %v516
    %v535 = vsub.f32 %v468, %v519
    %v536 = vmul.f32 %v520, 1.442695
    %v537 = vpow.pop %v536
    %v538 = vmul.f32 %v521, 1.442695
    %v539 = vpow.pop %v538
    %v540 = vmul.f32 %v522, 1.442695
    %v541 = vpow.pop %v540
    %v542 = vmul.f32 %v523, 1.442695
    %v543 = vpow.pop %v542
    %v544 = vmul.f32 %v524, 1.442695
    %v545 = vpow.pop %v544
    %v546 = vmul.f32 %v525, 1.442695
    %v547 = vpow.pop %v546
    %v548 = vmul.f32 %v526, 1.442695
    %v549 = vpow.pop %v548
    %v550 = vmul.f32 %v527, 1.442695
    %v551 = vpow.pop %v550
    %v552 = vmul.f32 %v528, 1.442695
    %v553 = vpow.pop %v552
    %v554 = vmul.f32 %v529, 1.442695
    %v555 = vpow.pop %v554
    %v556 = vmul.f32 %v530, 1.442695
    %v557 = vpow.pop %v556
    %v558 = vmul.f32 %v531, 1.442695
    %v559 = vpow.pop %v558
    %v560 = vmul.f32 %v532, 1.442695
    %v561 = vpow.pop %v560
    %v562 = vmul.f32 %v533, 1.442695
    %v563 = vpow.pop %v562
    %v564 = vmul.f32 %v534, 1.442695
    %v565 = vpow.pop %v564
    %v566 = vmul.f32 %v535, 1.442695
    %v567 = vpow.pop %v566
    %v568 = vsel %vm471, %v537, 0.0
    %569 = vadd.xlane.f32.xlu0 %v568
    %v570 = vpop.xlane.xlu0 %569
    %v571 = vsel %vm471, %v539, 0.0
    %572 = vadd.xlane.f32.xlu0 %v571
    %v573 = vpop.xlane.xlu0 %572
    %v574 = vsel %vm471, %v541, 0.0
    %575 = vadd.xlane.f32.xlu0 %v574
    %v576 = vpop.xlane.xlu0 %575
    %v577 = vsel %vm471, %v543, 0.0
    %578 = vadd.xlane.f32.xlu0 %v577
    %v579 = vpop.xlane.xlu0 %578
    %v580 = vsel %vm471, %v545, 0.0
    %581 = vadd.xlane.f32.xlu0 %v580
    %v582 = vpop.xlane.xlu0 %581
    %v583 = vsel %vm471, %v547, 0.0
    %584 = vadd.xlane.f32.xlu0 %v583
    %v585 = vpop.xlane.xlu0 %584
    %v586 = vsel %vm471, %v549, 0.0
    %587 = vadd.xlane.f32.xlu0 %v586
    %v588 = vpop.xlane.xlu0 %587
    %v589 = vsel %vm471, %v551, 0.0
    %590 = vadd.xlane.f32.xlu0 %v589
    %v591 = vpop.xlane.xlu0 %590
    %v592 = vsel %vm471, %v553, 0.0
    %593 = vadd.xlane.f32.xlu0 %v592
    %v594 = vpop.xlane.xlu0 %593
    %v595 = vsel %vm471, %v555, 0.0
    %596 = vadd.xlane.f32.xlu0 %v595
    %v597 = vpop.xlane.xlu0 %596
    %v598 = vsel %vm471, %v557, 0.0
    %599 = vadd.xlane.f32.xlu0 %v598
    %v600 = vpop.xlane.xlu0 %599
    %v601 = vsel %vm471, %v559, 0.0
    %602 = vadd.xlane.f32.xlu0 %v601
    %v603 = vpop.xlane.xlu0 %602
    %v604 = vsel %vm471, %v561, 0.0
    %605 = vadd.xlane.f32.xlu0 %v604
    %v606 = vpop.xlane.xlu0 %605
    %v607 = vsel %vm471, %v563, 0.0
    %608 = vadd.xlane.f32.xlu0 %v607
    %v609 = vpop.xlane.xlu0 %608
    %v610 = vsel %vm471, %v565, 0.0
    %611 = vadd.xlane.f32.xlu0 %v610
    %v612 = vpop.xlane.xlu0 %611
    %v613 = vsel %vm471, %v567, 0.0
    %614 = vadd.xlane.f32.xlu0 %v613
    %v615 = vpop.xlane.xlu0 %614
    %v616 = vrcp.pop %v570
    %v617 = vrcp.pop %v573
    %v618 = vrcp.pop %v576
    %v619 = vrcp.pop %v579
    %v620 = vrcp.pop %v582
    %v621 = vrcp.pop %v585
    %v622 = vrcp.pop %v588
    %v623 = vrcp.pop %v591
    %v624 = vrcp.pop %v594
    %v625 = vrcp.pop %v597
    %v626 = vrcp.pop %v600
    %v627 = vrcp.pop %v603
    %v628 = vrcp.pop %v606
    %v629 = vrcp.pop %v609
    %v630 = vrcp.pop %v612
    %v631 = vrcp.pop %v615
    %v632 = vmul.f32 %v537, %v616
    %v633 = vmul.f32 %v539, %v617
    %v634 = vmul.f32 %v541, %v618
    %v635 = vmul.f32 %v543, %v619
    %v636 = vmul.f32 %v545, %v620
    %v637 = vmul.f32 %v547, %v621
    %v638 = vmul.f32 %v549, %v622
    %v639 = vmul.f32 %v551, %v623
    %v640 = vmul.f32 %v553, %v624
    %v641 = vmul.f32 %v555, %v625
    %v642 = vmul.f32 %v557, %v626
    %v643 = vmul.f32 %v559, %v627
    %v644 = vmul.f32 %v561, %v628
    %v645 = vmul.f32 %v563, %v629
    %v646 = vmul.f32 %v565, %v630
    %v647 = vmul.f32 %v567, %v631
    %v648 = vld [vmem:[%s1] sm:$0xf]
    %v649 = vld [vmem:[%s1 + $0x4] sm:$0xf]
    %v650 = vld [vmem:[%s1 + $0x8] sm:$0xf]
    %v651 = vld [vmem:[%s1 + $0xc] sm:$0xf]
    %v652 = vld [vmem:[%s1 + $0x10] sm:$0xf]
    %v653 = vld [vmem:[%s1 + $0x14] sm:$0xf]
    %v654 = vld [vmem:[%s1 + $0x18] sm:$0xf]
    %v655 = vld [vmem:[%s1 + $0x1c] sm:$0xf]
    %v656 = vld [vmem:[%s1 + $0x20] sm:$0xf]
    %v657 = vld [vmem:[%s1 + $0x24] sm:$0xf]
    %v658 = vld [vmem:[%s1 + $0x28] sm:$0xf]
    %v659 = vld [vmem:[%s1 + $0x2c] sm:$0xf]
    %v660 = vld [vmem:[%s1 + $0x30] sm:$0xf]
    %v661 = vld [vmem:[%s1 + $0x34] sm:$0xf]
    %v662 = vld [vmem:[%s1 + $0x38] sm:$0xf]
    %v663 = vld [vmem:[%s1 + $0x3c] sm:$0xf]
    %v664 = vunpack.c.l.bf16 %v648
    %v665 = vunpack.c.l.bf16 %v649
    %v666 = vunpack.c.l.bf16 %v650
    %v667 = vunpack.c.l.bf16 %v651
    %v668 = vunpack.c.l.bf16 %v652
    %v669 = vunpack.c.l.bf16 %v653
    %v670 = vunpack.c.l.bf16 %v654
    %v671 = vunpack.c.l.bf16 %v655
    %v672 = vunpack.c.l.bf16 %v656
    %v673 = vunpack.c.l.bf16 %v657
    %v674 = vunpack.c.l.bf16 %v658
    %v675 = vunpack.c.l.bf16 %v659
    %v676 = vunpack.c.l.bf16 %v660
    %v677 = vunpack.c.l.bf16 %v661
    %v678 = vunpack.c.l.bf16 %v662
    %v679 = vunpack.c.l.bf16 %v663
    %681 = vset.pattern.permute.xlu0 0
    %682 = vperm.xlu0 %681, %v632
    %v683 = vpop.permute.xlu0 %682
    %686 = vset.pattern.permute.xlu0 0
    %687 = vperm.xlu0 %686, %v633
    %v688 = vpop.permute.xlu0 %687
    %691 = vset.pattern.permute.xlu0 0
    %692 = vperm.xlu0 %691, %v634
    %v693 = vpop.permute.xlu0 %692
    %696 = vset.pattern.permute.xlu0 0
    %697 = vperm.xlu0 %696, %v635
    %v698 = vpop.permute.xlu0 %697
    %701 = vset.pattern.permute.xlu0 0
    %702 = vperm.xlu0 %701, %v636
    %v703 = vpop.permute.xlu0 %702
    %706 = vset.pattern.permute.xlu0 0
    %707 = vperm.xlu0 %706, %v637
    %v708 = vpop.permute.xlu0 %707
    %711 = vset.pattern.permute.xlu0 0
    %712 = vperm.xlu0 %711, %v638
    %v713 = vpop.permute.xlu0 %712
    %716 = vset.pattern.permute.xlu0 0
    %717 = vperm.xlu0 %716, %v639
    %v718 = vpop.permute.xlu0 %717
    %721 = vset.pattern.permute.xlu0 0
    %722 = vperm.xlu0 %721, %v640
    %v723 = vpop.permute.xlu0 %722
    %726 = vset.pattern.permute.xlu0 0
    %727 = vperm.xlu0 %726, %v641
    %v728 = vpop.permute.xlu0 %727
    %731 = vset.pattern.permute.xlu0 0
    %732 = vperm.xlu0 %731, %v642
    %v733 = vpop.permute.xlu0 %732
    %736 = vset.pattern.permute.xlu0 0
    %737 = vperm.xlu0 %736, %v643
    %v738 = vpop.permute.xlu0 %737
    %741 = vset.pattern.permute.xlu0 0
    %742 = vperm.xlu0 %741, %v644
    %v743 = vpop.permute.xlu0 %742
    %746 = vset.pattern.permute.xlu0 0
    %747 = vperm.xlu0 %746, %v645
    %v748 = vpop.permute.xlu0 %747
    %751 = vset.pattern.permute.xlu0 0
    %752 = vperm.xlu0 %751, %v646
    %v753 = vpop.permute.xlu0 %752
    %756 = vset.pattern.permute.xlu0 0
    %757 = vperm.xlu0 %756, %v647
    %v758 = vpop.permute.xlu0 %757
    %v760 = vmul.f32 %v683, %v664
    %v761 = vmul.f32 %v688, %v665
    %v762 = vmul.f32 %v693, %v666
    %v763 = vmul.f32 %v698, %v667
    %v764 = vmul.f32 %v703, %v668
    %v765 = vmul.f32 %v708, %v669
    %v766 = vmul.f32 %v713, %v670
    %v767 = vmul.f32 %v718, %v671
    %v768 = vmul.f32 %v723, %v672
    %v769 = vmul.f32 %v728, %v673
    %v770 = vmul.f32 %v733, %v674
    %v771 = vmul.f32 %v738, %v675
    %v772 = vmul.f32 %v743, %v676
    %v773 = vmul.f32 %v748, %v677
    %v774 = vmul.f32 %v753, %v678
    %v775 = vmul.f32 %v758, %v679
    %776 = vset.pattern.permute.xlu0 1
    %777 = vperm.xlu0 %776, %v632
    %v778 = vpop.permute.xlu0 %777
    %780 = vset.pattern.permute.xlu0 1
    %781 = vperm.xlu0 %780, %v633
    %v782 = vpop.permute.xlu0 %781
    %784 = vset.pattern.permute.xlu0 1
    %785 = vperm.xlu0 %784, %v634
    %v786 = vpop.permute.xlu0 %785
    %788 = vset.pattern.permute.xlu0 1
    %789 = vperm.xlu0 %788, %v635
    %v790 = vpop.permute.xlu0 %789
    %792 = vset.pattern.permute.xlu0 1
    %793 = vperm.xlu0 %792, %v636
    %v794 = vpop.permute.xlu0 %793
    %796 = vset.pattern.permute.xlu0 1
    %797 = vperm.xlu0 %796, %v637
    %v798 = vpop.permute.xlu0 %797
    %800 = vset.pattern.permute.xlu0 1
    %801 = vperm.xlu0 %800, %v638
    %v802 = vpop.permute.xlu0 %801
    %804 = vset.pattern.permute.xlu0 1
    %805 = vperm.xlu0 %804, %v639
    %v806 = vpop.permute.xlu0 %805
    %808 = vset.pattern.permute.xlu0 1
    %809 = vperm.xlu0 %808, %v640
    %v810 = vpop.permute.xlu0 %809
    %812 = vset.pattern.permute.xlu0 1
    %813 = vperm.xlu0 %812, %v641
    %v814 = vpop.permute.xlu0 %813
    %816 = vset.pattern.permute.xlu0 1
    %817 = vperm.xlu0 %816, %v642
    %v818 = vpop.permute.xlu0 %817
    %820 = vset.pattern.permute.xlu0 1
    %821 = vperm.xlu0 %820, %v643
    %v822 = vpop.permute.xlu0 %821
    %824 = vset.pattern.permute.xlu0 1
    %825 = vperm.xlu0 %824, %v644
    %v826 = vpop.permute.xlu0 %825
    %828 = vset.pattern.permute.xlu0 1
    %829 = vperm.xlu0 %828, %v645
    %v830 = vpop.permute.xlu0 %829
    %832 = vset.pattern.permute.xlu0 1
    %833 = vperm.xlu0 %832, %v646
    %v834 = vpop.permute.xlu0 %833
    %836 = vset.pattern.permute.xlu0 1
    %837 = vperm.xlu0 %836, %v647
    %v838 = vpop.permute.xlu0 %837
    %v840 = vmul.f32 %v778, %v664
    %v841 = vmul.f32 %v782, %v665
    %v842 = vmul.f32 %v786, %v666
    %v843 = vmul.f32 %v790, %v667
    %v844 = vmul.f32 %v794, %v668
    %v845 = vmul.f32 %v798, %v669
    %v846 = vmul.f32 %v802, %v670
    %v847 = vmul.f32 %v806, %v671
    %v848 = vmul.f32 %v810, %v672
    %v849 = vmul.f32 %v814, %v673
    %v850 = vmul.f32 %v818, %v674
    %v851 = vmul.f32 %v822, %v675
    %v852 = vmul.f32 %v826, %v676
    %v853 = vmul.f32 %v830, %v677
    %v854 = vmul.f32 %v834, %v678
    %v855 = vmul.f32 %v838, %v679
    %872 = vrot.lane.b32.xlu0 %v840, 120
    %v873 = vpop.permute.xlu0 %872
    %874 = vrot.lane.b32.xlu0 %v841, 120
    %v875 = vpop.permute.xlu0 %874
    %876 = vrot.lane.b32.xlu0 %v842, 120
    %v877 = vpop.permute.xlu0 %876
    %878 = vrot.lane.b32.xlu0 %v843, 120
    %v879 = vpop.permute.xlu0 %878
    %880 = vrot.lane.b32.xlu0 %v844, 120
    %v881 = vpop.permute.xlu0 %880
    %882 = vrot.lane.b32.xlu0 %v845, 120
    %v883 = vpop.permute.xlu0 %882
    %884 = vrot.lane.b32.xlu0 %v846, 120
    %v885 = vpop.permute.xlu0 %884
    %886 = vrot.lane.b32.xlu0 %v847, 120
    %v887 = vpop.permute.xlu0 %886
    %888 = vrot.lane.b32.xlu0 %v848, 120
    %v889 = vpop.permute.xlu0 %888
    %890 = vrot.lane.b32.xlu0 %v849, 120
    %v891 = vpop.permute.xlu0 %890
    %892 = vrot.lane.b32.xlu0 %v850, 120
    %v893 = vpop.permute.xlu0 %892
    %894 = vrot.lane.b32.xlu0 %v851, 120
    %v895 = vpop.permute.xlu0 %894
    %896 = vrot.lane.b32.xlu0 %v852, 120
    %v897 = vpop.permute.xlu0 %896
    %898 = vrot.lane.b32.xlu0 %v853, 120
    %v899 = vpop.permute.xlu0 %898
    %900 = vrot.lane.b32.xlu0 %v854, 120
    %v901 = vpop.permute.xlu0 %900
    %902 = vrot.lane.b32.xlu0 %v855, 120
    %v903 = vpop.permute.xlu0 %902
    %v920 = vadd.f32 %v760, %v873
    %v921 = vadd.f32 %v761, %v875
    %v922 = vadd.f32 %v762, %v877
    %v923 = vadd.f32 %v763, %v879
    %v924 = vadd.f32 %v764, %v881
    %v925 = vadd.f32 %v765, %v883
    %v926 = vadd.f32 %v766, %v885
    %v927 = vadd.f32 %v767, %v887
    %v928 = vadd.f32 %v768, %v889
    %v929 = vadd.f32 %v769, %v891
    %v930 = vadd.f32 %v770, %v893
    %v931 = vadd.f32 %v771, %v895
    %v932 = vadd.f32 %v772, %v897
    %v933 = vadd.f32 %v773, %v899
    %v934 = vadd.f32 %v774, %v901
    %v935 = vadd.f32 %v775, %v903
    %936 = vset.pattern.permute.xlu0 2
    %937 = vperm.xlu0 %936, %v632
    %v938 = vpop.permute.xlu0 %937
    %940 = vset.pattern.permute.xlu0 2
    %941 = vperm.xlu0 %940, %v633
    %v942 = vpop.permute.xlu0 %941
    %944 = vset.pattern.permute.xlu0 2
    %945 = vperm.xlu0 %944, %v634
    %v946 = vpop.permute.xlu0 %945
    %948 = vset.pattern.permute.xlu0 2
    %949 = vperm.xlu0 %948, %v635
    %v950 = vpop.permute.xlu0 %949
    %952 = vset.pattern.permute.xlu0 2
    %953 = vperm.xlu0 %952, %v636
    %v954 = vpop.permute.xlu0 %953
    %956 = vset.pattern.permute.xlu0 2
    %957 = vperm.xlu0 %956, %v637
    %v958 = vpop.permute.xlu0 %957
    %960 = vset.pattern.permute.xlu0 2
    %961 = vperm.xlu0 %960, %v638
    %v962 = vpop.permute.xlu0 %961
    %964 = vset.pattern.permute.xlu0 2
    %965 = vperm.xlu0 %964, %v639
    %v966 = vpop.permute.xlu0 %965
    %968 = vset.pattern.permute.xlu0 2
    %969 = vperm.xlu0 %968, %v640
    %v970 = vpop.permute.xlu0 %969
    %972 = vset.pattern.permute.xlu0 2
    %973 = vperm.xlu0 %972, %v641
    %v974 = vpop.permute.xlu0 %973
    %976 = vset.pattern.permute.xlu0 2
    %977 = vperm.xlu0 %976, %v642
    %v978 = vpop.permute.xlu0 %977
    %980 = vset.pattern.permute.xlu0 2
    %981 = vperm.xlu0 %980, %v643
    %v982 = vpop.permute.xlu0 %981
    %984 = vset.pattern.permute.xlu0 2
    %985 = vperm.xlu0 %984, %v644
    %v986 = vpop.permute.xlu0 %985
    %988 = vset.pattern.permute.xlu0 2
    %989 = vperm.xlu0 %988, %v645
    %v990 = vpop.permute.xlu0 %989
    %992 = vset.pattern.permute.xlu0 2
    %993 = vperm.xlu0 %992, %v646
    %v994 = vpop.permute.xlu0 %993
    %996 = vset.pattern.permute.xlu0 2
    %997 = vperm.xlu0 %996, %v647
    %v998 = vpop.permute.xlu0 %997
    %v1000 = vmul.f32 %v938, %v664
    %v1001 = vmul.f32 %v942, %v665
    %v1002 = vmul.f32 %v946, %v666
    %v1003 = vmul.f32 %v950, %v667
    %v1004 = vmul.f32 %v954, %v668
    %v1005 = vmul.f32 %v958, %v669
    %v1006 = vmul.f32 %v962, %v670
    %v1007 = vmul.f32 %v966, %v671
    %v1008 = vmul.f32 %v970, %v672
    %v1009 = vmul.f32 %v974, %v673
    %v1010 = vmul.f32 %v978, %v674
    %v1011 = vmul.f32 %v982, %v675
    %v1012 = vmul.f32 %v986, %v676
    %v1013 = vmul.f32 %v990, %v677
    %v1014 = vmul.f32 %v994, %v678
    %v1015 = vmul.f32 %v998, %v679
    %1032 = vrot.lane.b32.xlu0 %v1000, 112
    %v1033 = vpop.permute.xlu0 %1032
    %1034 = vrot.lane.b32.xlu0 %v1001, 112
    %v1035 = vpop.permute.xlu0 %1034
    %1036 = vrot.lane.b32.xlu0 %v1002, 112
    %v1037 = vpop.permute.xlu0 %1036
    %1038 = vrot.lane.b32.xlu0 %v1003, 112
    %v1039 = vpop.permute.xlu0 %1038
    %1040 = vrot.lane.b32.xlu0 %v1004, 112
    %v1041 = vpop.permute.xlu0 %1040
    %1042 = vrot.lane.b32.xlu0 %v1005, 112
    %v1043 = vpop.permute.xlu0 %1042
    %1044 = vrot.lane.b32.xlu0 %v1006, 112
    %v1045 = vpop.permute.xlu0 %1044
    %1046 = vrot.lane.b32.xlu0 %v1007, 112
    %v1047 = vpop.permute.xlu0 %1046
    %1048 = vrot.lane.b32.xlu0 %v1008, 112
    %v1049 = vpop.permute.xlu0 %1048
    %1050 = vrot.lane.b32.xlu0 %v1009, 112
    %v1051 = vpop.permute.xlu0 %1050
    %1052 = vrot.lane.b32.xlu0 %v1010, 112
    %v1053 = vpop.permute.xlu0 %1052
    %1054 = vrot.lane.b32.xlu0 %v1011, 112
    %v1055 = vpop.permute.xlu0 %1054
    %1056 = vrot.lane.b32.xlu0 %v1012, 112
    %v1057 = vpop.permute.xlu0 %1056
    %1058 = vrot.lane.b32.xlu0 %v1013, 112
    %v1059 = vpop.permute.xlu0 %1058
    %1060 = vrot.lane.b32.xlu0 %v1014, 112
    %v1061 = vpop.permute.xlu0 %1060
    %1062 = vrot.lane.b32.xlu0 %v1015, 112
    %v1063 = vpop.permute.xlu0 %1062
    %v1080 = vadd.f32 %v920, %v1033
    %v1081 = vadd.f32 %v921, %v1035
    %v1082 = vadd.f32 %v922, %v1037
    %v1083 = vadd.f32 %v923, %v1039
    %v1084 = vadd.f32 %v924, %v1041
    %v1085 = vadd.f32 %v925, %v1043
    %v1086 = vadd.f32 %v926, %v1045
    %v1087 = vadd.f32 %v927, %v1047
    %v1088 = vadd.f32 %v928, %v1049
    %v1089 = vadd.f32 %v929, %v1051
    %v1090 = vadd.f32 %v930, %v1053
    %v1091 = vadd.f32 %v931, %v1055
    %v1092 = vadd.f32 %v932, %v1057
    %v1093 = vadd.f32 %v933, %v1059
    %v1094 = vadd.f32 %v934, %v1061
    %v1095 = vadd.f32 %v935, %v1063
    %1096 = vset.pattern.permute.xlu0 3
    %1097 = vperm.xlu0 %1096, %v632
    %v1098 = vpop.permute.xlu0 %1097
    %1100 = vset.pattern.permute.xlu0 3
    %1101 = vperm.xlu0 %1100, %v633
    %v1102 = vpop.permute.xlu0 %1101
    %1104 = vset.pattern.permute.xlu0 3
    %1105 = vperm.xlu0 %1104, %v634
    %v1106 = vpop.permute.xlu0 %1105
    %1108 = vset.pattern.permute.xlu0 3
    %1109 = vperm.xlu0 %1108, %v635
    %v1110 = vpop.permute.xlu0 %1109
    %1112 = vset.pattern.permute.xlu0 3
    %1113 = vperm.xlu0 %1112, %v636
    %v1114 = vpop.permute.xlu0 %1113
    %1116 = vset.pattern.permute.xlu0 3
    %1117 = vperm.xlu0 %1116, %v637
    %v1118 = vpop.permute.xlu0 %1117
    %1120 = vset.pattern.permute.xlu0 3
    %1121 = vperm.xlu0 %1120, %v638
    %v1122 = vpop.permute.xlu0 %1121
    %1124 = vset.pattern.permute.xlu0 3
    %1125 = vperm.xlu0 %1124, %v639
    %v1126 = vpop.permute.xlu0 %1125
    %1128 = vset.pattern.permute.xlu0 3
    %1129 = vperm.xlu0 %1128, %v640
    %v1130 = vpop.permute.xlu0 %1129
    %1132 = vset.pattern.permute.xlu0 3
    %1133 = vperm.xlu0 %1132, %v641
    %v1134 = vpop.permute.xlu0 %1133
    %1136 = vset.pattern.permute.xlu0 3
    %1137 = vperm.xlu0 %1136, %v642
    %v1138 = vpop.permute.xlu0 %1137
    %1140 = vset.pattern.permute.xlu0 3
    %1141 = vperm.xlu0 %1140, %v643
    %v1142 = vpop.permute.xlu0 %1141
    %1144 = vset.pattern.permute.xlu0 3
    %1145 = vperm.xlu0 %1144, %v644
    %v1146 = vpop.permute.xlu0 %1145
    %1148 = vset.pattern.permute.xlu0 3
    %1149 = vperm.xlu0 %1148, %v645
    %v1150 = vpop.permute.xlu0 %1149
    %1152 = vset.pattern.permute.xlu0 3
    %1153 = vperm.xlu0 %1152, %v646
    %v1154 = vpop.permute.xlu0 %1153
    %1156 = vset.pattern.permute.xlu0 3
    %1157 = vperm.xlu0 %1156, %v647
    %v1158 = vpop.permute.xlu0 %1157
    %v1160 = vmul.f32 %v1098, %v664
    %v1161 = vmul.f32 %v1102, %v665
    %v1162 = vmul.f32 %v1106, %v666
    %v1163 = vmul.f32 %v1110, %v667
    %v1164 = vmul.f32 %v1114, %v668
    %v1165 = vmul.f32 %v1118, %v669
    %v1166 = vmul.f32 %v1122, %v670
    %v1167 = vmul.f32 %v1126, %v671
    %v1168 = vmul.f32 %v1130, %v672
    %v1169 = vmul.f32 %v1134, %v673
    %v1170 = vmul.f32 %v1138, %v674
    %v1171 = vmul.f32 %v1142, %v675
    %v1172 = vmul.f32 %v1146, %v676
    %v1173 = vmul.f32 %v1150, %v677
    %v1174 = vmul.f32 %v1154, %v678
    %v1175 = vmul.f32 %v1158, %v679
    %1192 = vrot.lane.b32.xlu0 %v1160, 104
    %v1193 = vpop.permute.xlu0 %1192
    %1194 = vrot.lane.b32.xlu0 %v1161, 104
    %v1195 = vpop.permute.xlu0 %1194
    %1196 = vrot.lane.b32.xlu0 %v1162, 104
    %v1197 = vpop.permute.xlu0 %1196
    %1198 = vrot.lane.b32.xlu0 %v1163, 104
    %v1199 = vpop.permute.xlu0 %1198
    %1200 = vrot.lane.b32.xlu0 %v1164, 104
    %v1201 = vpop.permute.xlu0 %1200
    %1202 = vrot.lane.b32.xlu0 %v1165, 104
    %v1203 = vpop.permute.xlu0 %1202
    %1204 = vrot.lane.b32.xlu0 %v1166, 104
    %v1205 = vpop.permute.xlu0 %1204
    %1206 = vrot.lane.b32.xlu0 %v1167, 104
    %v1207 = vpop.permute.xlu0 %1206
    %1208 = vrot.lane.b32.xlu0 %v1168, 104
    %v1209 = vpop.permute.xlu0 %1208
    %1210 = vrot.lane.b32.xlu0 %v1169, 104
    %v1211 = vpop.permute.xlu0 %1210
    %1212 = vrot.lane.b32.xlu0 %v1170, 104
    %v1213 = vpop.permute.xlu0 %1212
    %1214 = vrot.lane.b32.xlu0 %v1171, 104
    %v1215 = vpop.permute.xlu0 %1214
    %1216 = vrot.lane.b32.xlu0 %v1172, 104
    %v1217 = vpop.permute.xlu0 %1216
    %1218 = vrot.lane.b32.xlu0 %v1173, 104
    %v1219 = vpop.permute.xlu0 %1218
    %1220 = vrot.lane.b32.xlu0 %v1174, 104
    %v1221 = vpop.permute.xlu0 %1220
    %1222 = vrot.lane.b32.xlu0 %v1175, 104
    %v1223 = vpop.permute.xlu0 %1222
    %v1240 = vadd.f32 %v1080, %v1193
    %v1241 = vadd.f32 %v1081, %v1195
    %v1242 = vadd.f32 %v1082, %v1197
    %v1243 = vadd.f32 %v1083, %v1199
    %v1244 = vadd.f32 %v1084, %v1201
    %v1245 = vadd.f32 %v1085, %v1203
    %v1246 = vadd.f32 %v1086, %v1205
    %v1247 = vadd.f32 %v1087, %v1207
    %v1248 = vadd.f32 %v1088, %v1209
    %v1249 = vadd.f32 %v1089, %v1211
    %v1250 = vadd.f32 %v1090, %v1213
    %v1251 = vadd.f32 %v1091, %v1215
    %v1252 = vadd.f32 %v1092, %v1217
    %v1253 = vadd.f32 %v1093, %v1219
    %v1254 = vadd.f32 %v1094, %v1221
    %v1255 = vadd.f32 %v1095, %v1223
    %vm1256 = vcmask 64512
    %v1257 = vsel %vm1256, %v1240, -inf
    %1258 = vmax.xlane.f32.xlu0 %v1257
    %v1259 = vpop.xlane.xlu0 %1258
    %v1260 = vsel %vm1256, %v1241, -inf
    %1261 = vmax.xlane.f32.xlu0 %v1260
    %v1262 = vpop.xlane.xlu0 %1261
    %v1263 = vsel %vm1256, %v1242, -inf
    %1264 = vmax.xlane.f32.xlu0 %v1263
    %v1265 = vpop.xlane.xlu0 %1264
    %v1266 = vsel %vm1256, %v1243, -inf
    %1267 = vmax.xlane.f32.xlu0 %v1266
    %v1268 = vpop.xlane.xlu0 %1267
    %v1269 = vsel %vm1256, %v1244, -inf
    %1270 = vmax.xlane.f32.xlu0 %v1269
    %v1271 = vpop.xlane.xlu0 %1270
    %v1272 = vsel %vm1256, %v1245, -inf
    %1273 = vmax.xlane.f32.xlu0 %v1272
    %v1274 = vpop.xlane.xlu0 %1273
    %v1275 = vsel %vm1256, %v1246, -inf
    %1276 = vmax.xlane.f32.xlu0 %v1275
    %v1277 = vpop.xlane.xlu0 %1276
    %v1278 = vsel %vm1256, %v1247, -inf
    %1279 = vmax.xlane.f32.xlu0 %v1278
    %v1280 = vpop.xlane.xlu0 %1279
    %v1281 = vsel %vm1256, %v1248, -inf
    %1282 = vmax.xlane.f32.xlu0 %v1281
    %v1283 = vpop.xlane.xlu0 %1282
    %v1284 = vsel %vm1256, %v1249, -inf
    %1285 = vmax.xlane.f32.xlu0 %v1284
    %v1286 = vpop.xlane.xlu0 %1285
    %v1287 = vsel %vm1256, %v1250, -inf
    %1288 = vmax.xlane.f32.xlu0 %v1287
    %v1289 = vpop.xlane.xlu0 %1288
    %v1290 = vsel %vm1256, %v1251, -inf
    %1291 = vmax.xlane.f32.xlu0 %v1290
    %v1292 = vpop.xlane.xlu0 %1291
    %v1293 = vsel %vm1256, %v1252, -inf
    %1294 = vmax.xlane.f32.xlu0 %v1293
    %v1295 = vpop.xlane.xlu0 %1294
    %v1296 = vsel %vm1256, %v1253, -inf
    %1297 = vmax.xlane.f32.xlu0 %v1296
    %v1298 = vpop.xlane.xlu0 %1297
    %v1299 = vsel %vm1256, %v1254, -inf
    %1300 = vmax.xlane.f32.xlu0 %v1299
    %v1301 = vpop.xlane.xlu0 %1300
    %v1302 = vsel %vm1256, %v1255, -inf
    %1303 = vmax.xlane.f32.xlu0 %v1302
    %v1304 = vpop.xlane.xlu0 %1303
    %v1305 = vsub.f32 %v1240, %v1259
    %v1306 = vsub.f32 %v1241, %v1262
    %v1307 = vsub.f32 %v1242, %v1265
    %v1308 = vsub.f32 %v1243, %v1268
    %v1309 = vsub.f32 %v1244, %v1271
    %v1310 = vsub.f32 %v1245, %v1274
    %v1311 = vsub.f32 %v1246, %v1277
    %v1312 = vsub.f32 %v1247, %v1280
    %v1313 = vsub.f32 %v1248, %v1283
    %v1314 = vsub.f32 %v1249, %v1286
    %v1315 = vsub.f32 %v1250, %v1289
    %v1316 = vsub.f32 %v1251, %v1292
    %v1317 = vsub.f32 %v1252, %v1295
    %v1318 = vsub.f32 %v1253, %v1298
    %v1319 = vsub.f32 %v1254, %v1301
    %v1320 = vsub.f32 %v1255, %v1304
    %v1321 = vmul.f32 %v1305, 1.442695
    %v1322 = vpow.pop %v1321
    %v1323 = vmul.f32 %v1306, 1.442695
    %v1324 = vpow.pop %v1323
    %v1325 = vmul.f32 %v1307, 1.442695
    %v1326 = vpow.pop %v1325
    %v1327 = vmul.f32 %v1308, 1.442695
    %v1328 = vpow.pop %v1327
    %v1329 = vmul.f32 %v1309, 1.442695
    %v1330 = vpow.pop %v1329
    %v1331 = vmul.f32 %v1310, 1.442695
    %v1332 = vpow.pop %v1331
    %v1333 = vmul.f32 %v1311, 1.442695
    %v1334 = vpow.pop %v1333
    %v1335 = vmul.f32 %v1312, 1.442695
    %v1336 = vpow.pop %v1335
    %v1337 = vmul.f32 %v1313, 1.442695
    %v1338 = vpow.pop %v1337
    %v1339 = vmul.f32 %v1314, 1.442695
    %v1340 = vpow.pop %v1339
    %v1341 = vmul.f32 %v1315, 1.442695
    %v1342 = vpow.pop %v1341
    %v1343 = vmul.f32 %v1316, 1.442695
    %v1344 = vpow.pop %v1343
    %v1345 = vmul.f32 %v1317, 1.442695
    %v1346 = vpow.pop %v1345
    %v1347 = vmul.f32 %v1318, 1.442695
    %v1348 = vpow.pop %v1347
    %v1349 = vmul.f32 %v1319, 1.442695
    %v1350 = vpow.pop %v1349
    %v1351 = vmul.f32 %v1320, 1.442695
    %v1352 = vpow.pop %v1351
    %v1353 = vsel %vm1256, %v1322, 0.0
    %1354 = vadd.xlane.f32.xlu0 %v1353
    %v1355 = vpop.xlane.xlu0 %1354
    %v1356 = vsel %vm1256, %v1324, 0.0
    %1357 = vadd.xlane.f32.xlu0 %v1356
    %v1358 = vpop.xlane.xlu0 %1357
    %v1359 = vsel %vm1256, %v1326, 0.0
    %1360 = vadd.xlane.f32.xlu0 %v1359
    %v1361 = vpop.xlane.xlu0 %1360
    %v1362 = vsel %vm1256, %v1328, 0.0
    %1363 = vadd.xlane.f32.xlu0 %v1362
    %v1364 = vpop.xlane.xlu0 %1363
    %v1365 = vsel %vm1256, %v1330, 0.0
    %1366 = vadd.xlane.f32.xlu0 %v1365
    %v1367 = vpop.xlane.xlu0 %1366
    %v1368 = vsel %vm1256, %v1332, 0.0
    %1369 = vadd.xlane.f32.xlu0 %v1368
    %v1370 = vpop.xlane.xlu0 %1369
    %v1371 = vsel %vm1256, %v1334, 0.0
    %1372 = vadd.xlane.f32.xlu0 %v1371
    %v1373 = vpop.xlane.xlu0 %1372
    %v1374 = vsel %vm1256, %v1336, 0.0
    %1375 = vadd.xlane.f32.xlu0 %v1374
    %v1376 = vpop.xlane.xlu0 %1375
    %v1377 = vsel %vm1256, %v1338, 0.0
    %1378 = vadd.xlane.f32.xlu0 %v1377
    %v1379 = vpop.xlane.xlu0 %1378
    %v1380 = vsel %vm1256, %v1340, 0.0
    %1381 = vadd.xlane.f32.xlu0 %v1380
    %v1382 = vpop.xlane.xlu0 %1381
    %v1383 = vsel %vm1256, %v1342, 0.0
    %1384 = vadd.xlane.f32.xlu0 %v1383
    %v1385 = vpop.xlane.xlu0 %1384
    %v1386 = vsel %vm1256, %v1344, 0.0
    %1387 = vadd.xlane.f32.xlu0 %v1386
    %v1388 = vpop.xlane.xlu0 %1387
    %v1389 = vsel %vm1256, %v1346, 0.0
    %1390 = vadd.xlane.f32.xlu0 %v1389
    %v1391 = vpop.xlane.xlu0 %1390
    %v1392 = vsel %vm1256, %v1348, 0.0
    %1393 = vadd.xlane.f32.xlu0 %v1392
    %v1394 = vpop.xlane.xlu0 %1393
    %v1395 = vsel %vm1256, %v1350, 0.0
    %1396 = vadd.xlane.f32.xlu0 %v1395
    %v1397 = vpop.xlane.xlu0 %1396
    %v1398 = vsel %vm1256, %v1352, 0.0
    %1399 = vadd.xlane.f32.xlu0 %v1398
    %v1400 = vpop.xlane.xlu0 %1399
    %v1401 = vrcp.pop %v1355
    %v1402 = vmul.f32 %v1322, %v1401
    %v1403 = vrcp.pop %v1358
    %v1404 = vmul.f32 %v1324, %v1403
    %v1405 = vrcp.pop %v1361
    %v1406 = vmul.f32 %v1326, %v1405
    %v1407 = vrcp.pop %v1364
    %v1408 = vmul.f32 %v1328, %v1407
    %v1409 = vrcp.pop %v1367
    %v1410 = vmul.f32 %v1330, %v1409
    %v1411 = vrcp.pop %v1370
    %v1412 = vmul.f32 %v1332, %v1411
    %v1413 = vrcp.pop %v1373
    %v1414 = vmul.f32 %v1334, %v1413
    %v1415 = vrcp.pop %v1376
    %v1416 = vmul.f32 %v1336, %v1415
    %v1417 = vrcp.pop %v1379
    %v1418 = vmul.f32 %v1338, %v1417
    %v1419 = vrcp.pop %v1382
    %v1420 = vmul.f32 %v1340, %v1419
    %v1421 = vrcp.pop %v1385
    %v1422 = vmul.f32 %v1342, %v1421
    %v1423 = vrcp.pop %v1388
    %v1424 = vmul.f32 %v1344, %v1423
    %v1425 = vrcp.pop %v1391
    %v1426 = vmul.f32 %v1346, %v1425
    %v1427 = vrcp.pop %v1394
    %v1428 = vmul.f32 %v1348, %v1427
    %v1429 = vrcp.pop %v1397
    %v1430 = vmul.f32 %v1350, %v1429
    %v1431 = vrcp.pop %v1400
    %v1432 = vmul.f32 %v1352, %v1431
    %1433 = vxpose.xlu0.b32.start [1/16] %v1402, 128
    %1434 = vxpose.xlu0.b32.cont [2/16] %v1404, 128
    %1435 = vxpose.xlu0.b32.cont [3/16] %v1406, 128
    %1436 = vxpose.xlu0.b32.cont [4/16] %v1408, 128
    %1437 = vxpose.xlu0.b32.cont [5/16] %v1410, 128
    %1438 = vxpose.xlu0.b32.cont [6/16] %v1412, 128
    %1439 = vxpose.xlu0.b32.cont [7/16] %v1414, 128
    %1440 = vxpose.xlu0.b32.cont [8/16] %v1416, 128
    %1441 = vxpose.xlu0.b32.cont [9/16] %v1418, 128
    %1442 = vxpose.xlu0.b32.cont [10/16] %v1420, 128
    %1443 = vxpose.xlu0.b32.cont [11/16] %v1422, 128
    %1444 = vxpose.xlu0.b32.cont [12/16] %v1424, 128
    %1445 = vxpose.xlu0.b32.cont [13/16] %v1426, 128
    %1446 = vxpose.xlu0.b32.cont [14/16] %v1428, 128
    %1447 = vxpose.xlu0.b32.cont [15/16] %v1430, 128
    %1448 = vxpose.xlu0.b32.end [16/16] %v1432, 128
    %v1449 = vpop.trf.xlu0
    %v1450 = vpop.trf.xlu0
    %v1451 = vpop.trf.xlu0
    %v1452 = vpop.trf.xlu0
    %v1453 = vpop.trf.xlu0
    %v1454 = vpop.trf.xlu0
    %v1455 = vpop.trf.xlu0
    %v1456 = vpop.trf.xlu0
    %v1457 = vpop.trf.xlu0
    %v1458 = vpop.trf.xlu0
    %v1459 = vpop.trf.xlu0
    %v1460 = vpop.trf.xlu0
    %v1461 = vpop.trf.xlu0
    %v1462 = vpop.trf.xlu0
    %v1463 = vpop.trf.xlu0
    %v1464 = vpop.trf.xlu0
    %1465 = vst [vmem:[#allocation2] sm:$0xff] %v1449
    %1466 = vxpose.xlu0.b32.start [1/16] %v632, 128
    %1467 = vxpose.xlu0.b32.cont [2/16] %v633, 128
    %1468 = vxpose.xlu0.b32.cont [3/16] %v634, 128
    %1469 = vxpose.xlu0.b32.cont [4/16] %v635, 128
    %1470 = vxpose.xlu0.b32.cont [5/16] %v636, 128
    %1471 = vxpose.xlu0.b32.cont [6/16] %v637, 128
    %1472 = vxpose.xlu0.b32.cont [7/16] %v638, 128
    %1473 = vxpose.xlu0.b32.cont [8/16] %v639, 128
    %1474 = vxpose.xlu0.b32.cont [9/16] %v640, 128
    %1475 = vxpose.xlu0.b32.cont [10/16] %v641, 128
    %1476 = vxpose.xlu0.b32.cont [11/16] %v642, 128
    %1477 = vxpose.xlu0.b32.cont [12/16] %v643, 128
    %1478 = vxpose.xlu0.b32.cont [13/16] %v644, 128
    %1479 = vxpose.xlu0.b32.cont [14/16] %v645, 128
    %1480 = vxpose.xlu0.b32.cont [15/16] %v646, 128
    %1481 = vxpose.xlu0.b32.end [16/16] %v647, 128
    %v1482 = vpop.trf.xlu0
    %v1483 = vpop.trf.xlu0
    %v1484 = vpop.trf.xlu0
    %v1485 = vpop.trf.xlu0
    %v1486 = vpop.trf.xlu0
    %v1487 = vpop.trf.xlu0
    %v1488 = vpop.trf.xlu0
    %v1489 = vpop.trf.xlu0
    %v1490 = vpop.trf.xlu0
    %v1491 = vpop.trf.xlu0
    %v1492 = vpop.trf.xlu0
    %v1493 = vpop.trf.xlu0
    %v1494 = vpop.trf.xlu0
    %v1495 = vpop.trf.xlu0
    %v1496 = vpop.trf.xlu0
    %v1497 = vpop.trf.xlu0
    %1498 = vst [vmem:[#allocation4] sm:$0xf] %v1482
    // Predicated region
    $region26: #{tpu_custom_call.1} parent=1 // pred_check
      _
    $region27: #{tpu_custom_call.1} parent=1 // pred_check_branch
      %1500 = sbr.rel (0) target = $region29
    $region28: #{tpu_custom_call.1} parent=1 // pred_region
      %s1502 = ssub.s32 128, 128
      %1503 = vsyncadd [#allocation3], %s1502
      %s1505 = sshll.u32 [#allocation2], 4
      %s1506 = int_to_ptr.vmem [resolvable:$true] %s1505
      %1508 = dma.vmem_to_hbm [thread:$0]  %s1506, 128, %s6, [#allocation3]
    $region29: #{tpu_custom_call.1} parent=1 // pred_fallthru
      _
    // Predicated region
    $region30: #{tpu_custom_call.1} parent=1 // pred_check
      _
    $region31: #{tpu_custom_call.1} parent=1 // pred_check_branch
      %1510 = sbr.rel (0) target = $region33
    $region32: #{tpu_custom_call.1} parent=1 // pred_region
      %s1512 = ssub.s32 64, 64
      %1513 = vsyncadd [#allocation5], %s1512
      %s1515 = sshll.u32 [#allocation4], 4
      %s1516 = int_to_ptr.vmem [resolvable:$true] %s1515
      %1518 = dma.vmem_to_hbm [thread:$0]  %s1516, 64, %s7, [#allocation5]
    $region33: #{tpu_custom_call.1} parent=1 // pred_fallthru
      _
    // Predicated region
    $region34: #{tpu_custom_call.1} parent=1 // pred_check
      _
    $region35: #{tpu_custom_call.1} parent=1 // pred_check_branch
      %1520 = sbr.rel (0) target = $region37
    $region36: #{tpu_custom_call.1} parent=1 // pred_region
      %1521 = dma.done [#allocation3], 128
    $region37: #{tpu_custom_call.1} parent=1 // pred_fallthru
      _
    // Predicated region
    $region38: #{tpu_custom_call.1} parent=1 // pred_check
      _
    $region39: #{tpu_custom_call.1} parent=1 // pred_check_branch
      %1523 = sbr.rel (0) target = $region41
    $region40: #{tpu_custom_call.1} parent=1 // pred_region
      %1524 = dma.done [#allocation5], 64
    $region41: #{tpu_custom_call.1} parent=1 // pred_fallthru
      _
    %1525 = vsyncpa [#allocation3], 1
    %1526 = vsyncpa [#allocation5], 1

</llo_original>
